<compile_context>
chip_gen: v6e
topology: v6e:2x2x1
jax: 0.10.0
libtpu: 0.0.40
codegen_flags: <defaults>
</compile_context>

<pallas_src>
import functools

import jax
import jax.numpy as jnp
import numpy as np
from jax import lax
from jax.experimental import pallas as pl
from jax.experimental.pallas import tpu as pltpu


def _round_up(n, m):
    return ((n + m - 1) // m) * m


def _cdiv(a, b):
    return -(-a // b)


def _divisor_leq(n, cap, step):
    """Largest d <= cap with n % d == 0; assumes n % step == 0."""
    d = min(n, cap)
    if d >= n:
        return n
    d = max(step, (d // step) * step)
    while n % d:
        d -= step
    return d


def _bspec(block_shape, index_map, n_buffers=None):
    """BlockSpec; grid-invariant operands request single buffering."""
    if n_buffers is not None and hasattr(pl, "Buffered"):
        try:
            return pl.BlockSpec(block_shape, index_map,
                                pipeline_mode=pl.Buffered(n_buffers))
        except (TypeError, ValueError):
            pass
    return pl.BlockSpec(block_shape, index_map)


def _cost(flops, transcendentals, bytes_accessed):
    try:
        return pl.CostEstimate(flops=flops, transcendentals=transcendentals,
                               bytes_accessed=bytes_accessed)
    except Exception:
        return None


# ----------------------------- Pallas kernels ------------------------------


def _input_proj_kernel(x_ref, wih_ref, b_ref, xw_ref):
    # One lane-dense GEMM over a slab of (time*batch) rows.
    # bf16 MXU operands (cast in-kernel), f32 accumulate, bf16 output stream.
    acc = jnp.dot(x_ref[...].astype(jnp.bfloat16), wih_ref[...],
                  preferred_element_type=jnp.float32)
    xw_ref[...] = (acc + b_ref[...]).astype(xw_ref.dtype)


def _rnn_recurrence_kernel(t_true, t_padded,
                           xw_ref, whh_ref, h0_ref, out_ref, hfin_ref,
                           h_scratch):
    tb = pl.program_id(1)          # time-block index (sequential axis)
    tt = out_ref.shape[0]          # static time-block length
    hp = whh_ref.shape[0]

    @pl.when(tb == 0)
    def _():
        # Explicit cast: h0 may be narrower than the f32 carry.
        h_scratch[...] = h0_ref[...].astype(jnp.float32)

    # Hoist W_hh into vregs only when it is small (bf16 128x128 = 8 vregs);
    # larger weights are re-read from VMEM inside the loop to avoid spills.
    whh_hoisted = whh_ref[...] if hp * hp * 2 <= 64 * 1024 else None

    def step(i, h):
        whh = whh_hoisted if whh_hoisted is not None else whh_ref[...]
        pre = xw_ref[i].astype(jnp.float32) + jnp.dot(
            h.astype(jnp.bfloat16), whh, preferred_element_type=jnp.float32)
        h_new = jnp.tanh(pre)
        out_ref[i] = h_new.astype(out_ref.dtype)     # lane-dense (Hp=k*128)
        if t_padded != t_true:
            # Freeze the carry on zero-padded tail time steps so the final
            # state corresponds to the true last step T-1.
            h_new = jnp.where(tb * tt + i < t_true, h_new, h)
        return h_new

    h_last = lax.fori_loop(0, tt, step, h_scratch[...], unroll=min(tt, 8))
    h_scratch[...] = h_last

    # Final state: resident output block, written only on the last time block.
    @pl.when(tb == pl.num_programs(1) - 1)
    def _():
        hfin_ref[...] = h_last.astype(hfin_ref.dtype)


# ------------------------------- wrapper -----------------------------------


def rnn_forward(inputs, w_ih, w_hh, b_ih, b_hh, hidden_size,
                initial_state=None, batch_first=True):
    """inputs: (B, T, D) if batch_first else (T, B, D).

    Returns (outputs, (h_T,)) with outputs stacked as (T, B, H).
    """
    out_dtype = inputs.dtype
    if initial_state is None:
        batch = inputs.shape[0] if batch_first else inputs.shape[1]
        initial_state = jnp.zeros((batch, hidden_size), dtype=out_dtype)
    if batch_first:
        inputs = jnp.transpose(inputs, (1, 0, 2))   # -> (T, B, D)

    T, B, D = inputs.shape
    H = hidden_size
    Hp = _round_up(H, 128)   # lane-dense hidden dim
    Bp = _round_up(B, 8)     # sublane-aligned batch

    f32, bf16 = jnp.float32, jnp.bfloat16
    out_bytes = jnp.dtype(out_dtype).itemsize

    # ---- tile selection from an explicit VMEM budget (fits v5e's 16 MiB
    # default scoped limit, leaves headroom under v7x's 64 MiB physical) ----
    VMEM_BUDGET = 12 * 1024 * 1024

    # Batch block: guarantee >=2 blocks when Bp >= 16 so the "parallel" batch
    # axis can shard across both TensorCores on 2-TC chips (v7x).
    bb_cap = 256
    if Bp >= 16:
        bb_cap = min(bb_cap, max(8, (Bp // 2) // 8 * 8))
    Bb = _divisor_leq(Bp, bb_cap, 8)

    # Conservative fixed phase-2 cost (assume double buffering even for the
    # Buffered(1) operands): W_hh (bf16), h0 (f32), hfin (out), carry scratch.
    fixed2 = (2 * (Hp * Hp * 2) + 2 * (Bb * Hp * 4)
              + 2 * (Bb * Hp * out_bytes) + Bb * Hp * 4)
    per_t = 2 * Bb * Hp * (2 + out_bytes)   # dbl-buffered xw(bf16) + out slabs
    tt_cap = max(1, min(64, (VMEM_BUDGET - fixed2) // per_t))
    # Pad T up to a whole number of equal time blocks (avoids tiny Tt from
    # awkward T and the per-grid-step overhead that comes with it).
    n_tblocks = _cdiv(T, tt_cap)
    Tt = _cdiv(T, n_tblocks)
    Tp = Tt * n_tblocks

    # Zero-padded, pre-transposed parameters.  Padded rows/cols are zero, so
    # padded hidden lanes stay tanh(0)=0 and never contaminate real lanes.
    wih_t = jnp.zeros((D, Hp), bf16).at[:, :H].set(w_ih.T.astype(bf16))
    whh_t = jnp.zeros((Hp, Hp), bf16).at[:H, :H].set(w_hh.T.astype(bf16))
    bias = jnp.zeros((1, Hp), f32).at[0, :H].set((b_ih + b_hh).astype(f32))
    h0 = jnp.zeros((Bp, Hp), f32).at[:B, :H].set(initial_state.astype(f32))

    x_tm = inputs
    if Tp != T or Bp != B:
        x_tm = jnp.pad(x_tm, ((0, Tp - T), (0, Bp - B), (0, 0)))

    # ---- Phase 1: hoisted input projection (no sequential dependence) ----
    M = Tp * Bp
    x_flat = x_tm.reshape(M, D)

    per_row = 2 * (D * 4 + Hp * 2)                 # dbl-buffered x(f32)+xw(bf16)
    fixed1 = 2 * (D * Hp * 2 + Hp * 4)             # W_ih^T + bias
    mb_cap = max(8, min(2048, (VMEM_BUDGET - fixed1) // max(per_row, 1)))
    mb_cap = (mb_cap // 8) * 8
    Mb = _divisor_leq(M, mb_cap, 8)
    # TODO(synk): K-tile the contraction (D) axis with an f32 accumulator
    # scratch if D*Hp alone approaches the VMEM budget.

    xw = pl.pallas_call(
        _input_proj_kernel,
        out_shape=jax.ShapeDtypeStruct((M, Hp), bf16),
        grid_spec=pltpu.PrefetchScalarGridSpec(
            num_scalar_prefetch=0,
            grid=(M // Mb,),
            in_specs=[
                pl.BlockSpec((Mb, D), lambda m: (m, 0)),            # x rows
                _bspec((D, Hp), lambda m: (0, 0), n_buffers=1),     # W_ih^T
                _bspec((1, Hp), lambda m: (0, 0), n_buffers=1),     # fused bias
            ],
            out_specs=pl.BlockSpec((Mb, Hp), lambda m: (m, 0)),
        ),
        compiler_params=pltpu.CompilerParams(
            dimension_semantics=("parallel",),
            vmem_limit_bytes=32 * 1024 * 1024,
        ),
        cost_estimate=_cost(
            flops=2 * M * D * Hp,
            transcendentals=0,
            bytes_accessed=M * D * 4 + D * Hp * 2 + Hp * 4 + M * Hp * 2,
        ),
    )(x_flat, wih_t, bias)

    xw_tm = xw.reshape(Tp, Bp, Hp)

    # ---- Phase 2: time-blocked sequential recurrence ----
    kernel = functools.partial(_rnn_recurrence_kernel, T, Tp)

    outputs_p, h_final_p = pl.pallas_call(
        kernel,
        out_shape=(
            jax.ShapeDtypeStruct((Tp, Bp, Hp), out_dtype),   # per-step outputs
            jax.ShapeDtypeStruct((Bp, Hp), out_dtype),       # final hidden state
        ),
        grid_spec=pltpu.PrefetchScalarGridSpec(
            num_scalar_prefetch=0,
            grid=(Bp // Bb, Tp // Tt),
            in_specs=[
                pl.BlockSpec((Tt, Bb, Hp), lambda bb, tb: (tb, bb, 0)),   # xw
                _bspec((Hp, Hp), lambda bb, tb: (0, 0), n_buffers=1),     # W_hh^T
                _bspec((Bb, Hp), lambda bb, tb: (bb, 0), n_buffers=1),    # h0
            ],
            out_specs=[
                pl.BlockSpec((Tt, Bb, Hp), lambda bb, tb: (tb, bb, 0)),   # outs
                pl.BlockSpec((Bb, Hp), lambda bb, tb: (bb, 0)),           # final h
            ],
            scratch_shapes=[pltpu.VMEM((Bb, Hp), jnp.float32)],           # carry
        ),
        compiler_params=pltpu.CompilerParams(
            dimension_semantics=("parallel", "arbitrary"),
            vmem_limit_bytes=32 * 1024 * 1024,
        ),
        cost_estimate=_cost(
            flops=2 * Tp * Bp * Hp * Hp,
            transcendentals=Tp * Bp * Hp,
            bytes_accessed=(Tp * Bp * Hp * (2 + out_bytes)
                            + Hp * Hp * 2 + Bp * Hp * (4 + out_bytes)),
        ),
    )(xw_tm, whh_t, h0)

    outputs = outputs_p[:T, :B, :H]
    h_final = h_final_p[:B, :H]
    return outputs, (h_final,)


# ------------------------------ reference ----------------------------------


def reference_rnn(inputs, w_ih, w_hh, b_ih, b_hh, hidden_size, batch_first=True):
    """Pure-JAX f32 reference mirroring the PyTorch loop."""
    if batch_first:
        inputs = jnp.transpose(inputs, (1, 0, 2))
    B = inputs.shape[1]
    h = jnp.zeros((B, hidden_size), dtype=inputs.dtype)
    outs = []
    for t in range(inputs.shape[0]):
        x = inputs[t]
        h = jnp.tanh(x @ w_ih.T + b_ih + h @ w_hh.T + b_hh)
        outs.append(h)
    return jnp.stack(outs, axis=0), (h,)


if __name__ == "__main__":
    # Small shapes consistent with the module's forward.
    B, T, D, H = 8, 8, 16, 32

    key = jax.random.PRNGKey(0)
    k_x, k_wih, k_whh, k_bih, k_bhh = jax.random.split(key, 5)

    bound = 1.0 / np.sqrt(H)
    x = jax.random.normal(k_x, (B, T, D), dtype=jnp.float32)
    w_ih = jax.random.uniform(k_wih, (H, D), jnp.float32, -bound, bound)
    w_hh = jax.random.uniform(k_whh, (H, H), jnp.float32, -bound, bound)
    b_ih = jax.random.uniform(k_bih, (H,), jnp.float32, -bound, bound)
    b_hh = jax.random.uniform(k_bhh, (H,), jnp.float32, -bound, bound)

    outputs, (h_final,) = rnn_forward(x, w_ih, w_hh, b_ih, b_hh, H,
                                      initial_state=None, batch_first=True)
    jax.block_until_ready(outputs)
    jax.block_until_ready(h_final)

    ref_out, (ref_h,) = reference_rnn(x, w_ih, w_hh, b_ih, b_hh, H, batch_first=True)
    # bf16 xw / bf16 MXU operands (f32 carry) -> loosened tolerances vs f32 ref.
    np.testing.assert_allclose(np.asarray(outputs), np.asarray(ref_out),
                               rtol=2e-2, atol=2e-2)
    np.testing.assert_allclose(np.asarray(h_final), np.asarray(ref_h),
                               rtol=2e-2, atol=2e-2)

    print("KERNEL_OK")
</pallas_src>

<mosaic_0001>
module attributes {stable_mosaic.version = 11 : i64} {
  func.func @_input_proj_kernel(%arg0: i32, %arg1: memref<64x16xf32, #tpu.memory_space<vmem>>, %arg2: memref<16x128xbf16, #tpu.memory_space<vmem>>, %arg3: memref<1x128xf32, #tpu.memory_space<vmem>>, %arg4: memref<64x128xbf16, #tpu.memory_space<vmem>>) attributes {dimension_semantics = [#tpu.dimension_semantics<parallel>], iteration_bounds = array<i64: 1>, scalar_prefetch = 0 : i64, scratch_operands = 0 : i64, tpu.core_type = #tpu.core_type<tc>, window_params = [{transform_indices = @transform_0, window_bounds = array<i64: 64, 16>}, {pipeline_mode = #tpu.pipeline_mode<synchronous>, transform_indices = @transform_1, window_bounds = array<i64: 16, 128>}, {pipeline_mode = #tpu.pipeline_mode<synchronous>, transform_indices = @transform_2, window_bounds = array<i64: 1, 128>}, {transform_indices = @transform_3, window_bounds = array<i64: 64, 128>}]} {
    %c0 = arith.constant 0 : index
    %c0_0 = arith.constant 0 : index
    %0 = vector.load %arg1[%c0, %c0_0] : memref<64x16xf32, #tpu.memory_space<vmem>>, vector<64x16xf32>
    %1 = arith.truncf %0 : vector<64x16xf32> to vector<64x16xbf16>
    %c0_1 = arith.constant 0 : index
    %c0_2 = arith.constant 0 : index
    %2 = vector.load %arg2[%c0_1, %c0_2] : memref<16x128xbf16, #tpu.memory_space<vmem>>, vector<16x128xbf16>
    %cst = arith.constant dense<0.000000e+00> : vector<64x128xf32>
    %3 = tpu.matmul %1, %2, %cst {dimension_numbers = #tpu.dot_dimension_numbers<[1], [0], [0], [1], [0, 0, 1, 1], [], []>} : vector<64x16xbf16>, vector<16x128xbf16>, vector<64x128xf32> -> vector<64x128xf32>
    %c0_3 = arith.constant 0 : index
    %c0_4 = arith.constant 0 : index
    %4 = vector.load %arg3[%c0_3, %c0_4] : memref<1x128xf32, #tpu.memory_space<vmem>>, vector<1x128xf32>
    %5 = vector.broadcast %4 : vector<1x128xf32> to vector<64x128xf32>
    %6 = arith.addf %3, %5 : vector<64x128xf32>
    %7 = arith.truncf %6 : vector<64x128xf32> to vector<64x128xbf16>
    %c0_5 = arith.constant 0 : index
    %c0_6 = arith.constant 0 : index
    %8 = vector.load %arg4[%c0_5, %c0_6] : memref<64x128xbf16, #tpu.memory_space<vmem>>, vector<64x128xbf16>
    tpu.vector_store %arg4[%c0_5, %c0_6], %7 {strides = array<i32>} : memref<64x128xbf16, #tpu.memory_space<vmem>>, vector<64x128xbf16>,
    return
  }
  func.func @transform_0(%arg0: i32) -> (i32, i32) {
    %c0_i32 = arith.constant 0 : i32
    %c0_i32_0 = arith.constant 0 : i32
    return %arg0, %c0_i32 : i32, i32
  }
  func.func @transform_1(%arg0: i32) -> (i32, i32) {
    %c0_i32 = arith.constant 0 : i32
    %c0_i32_0 = arith.constant 0 : i32
    %c0_i32_1 = arith.constant 0 : i32
    return %c0_i32, %c0_i32_0 : i32, i32
  }
  func.func @transform_2(%arg0: i32) -> (i32, i32) {
    %c0_i32 = arith.constant 0 : i32
    %c0_i32_0 = arith.constant 0 : i32
    %c0_i32_1 = arith.constant 0 : i32
    return %c0_i32, %c0_i32_0 : i32, i32
  }
  func.func @transform_3(%arg0: i32) -> (i32, i32) {
    %c0_i32 = arith.constant 0 : i32
    %c0_i32_0 = arith.constant 0 : i32
    return %arg0, %c0_i32 : i32, i32
  }
}

</mosaic_0001>

<llo_original>
// kernel: tpu_custom_call.1
$region0: #{tpu_custom_call.1}
  #allocation0 [shape = 'u32[]', space=smem, size = 0x4, offset = 0x4, fixed_abs, tag = 'smem constant byte address 0x4 - core index']
  #allocation1 [shape = 'u32[144,128]{1,0:T(1,128)}', space=vmem, size = 0x12000, scoped, tag = 'internal scratch']
  %s0 = inlined_call_operand.vmem [shape: f32[64,16], index: 0, kind: input, shape index: {}]
  %s1 = inlined_call_operand.vmem [shape: bf16[16,128], index: 1, kind: input, shape index: {}]
  %s2 = inlined_call_operand.vmem [shape: f32[1,128], index: 2, kind: input, shape index: {}]
  %s3 = inlined_call_operand.hbm [shape: bf16[64,128], index: 3, kind: output, shape index: {}]
  %s4 = sld [smem:[#allocation0]]
  $region22: #{tpu_custom_call.1} parent=0
    _
  %s6 = ssub.s32 1, %s4
  %s7 = scalar_select 0, %s6, %s4
  $region1: #{tpu_custom_call.1} parent=0
    #allocation2 [shape = 'u8[16384]{0}', space=vmem, size = 0x4000, scoped, tag = 'output window, operand 0, single buffered']
    #allocation3 [shape = 's32[1]{0}', space=sflag, size = 0x4, scoped, tag = 'scoped memory for tpu_custom_call.1']
    %8 = vsyncpa [#allocation3], 0
    // Predicated region
    $region2: #{tpu_custom_call.1} parent=1 // pred_check
      _
    $region3: #{tpu_custom_call.1} parent=1 // pred_check_branch
      %10 = sbr.rel (0) target = $region5
    $region4: #{tpu_custom_call.1} parent=1 // pred_region
      _
    $region5: #{tpu_custom_call.1} parent=1 // pred_fallthru
      _
    // Predicated region
    $region6: #{tpu_custom_call.1} parent=1 // pred_check
      _
    $region7: #{tpu_custom_call.1} parent=1 // pred_check_branch
      %12 = sbr.rel (0) target = $region9
    $region8: #{tpu_custom_call.1} parent=1 // pred_region
      _
    $region9: #{tpu_custom_call.1} parent=1 // pred_fallthru
      _
    // Predicated region
    $region10: #{tpu_custom_call.1} parent=1 // pred_check
      _
    $region11: #{tpu_custom_call.1} parent=1 // pred_check_branch
      %14 = sbr.rel (0) target = $region13
    $region12: #{tpu_custom_call.1} parent=1 // pred_region
      _
    $region13: #{tpu_custom_call.1} parent=1 // pred_fallthru
      _
    %v16 = vld [vmem:[%s0] sm:$0xff]
    %v17 = vld [vmem:[%s0 + $0x8] sm:$0xff]
    %v18 = vld [vmem:[%s0 + $0x10] sm:$0xff]
    %v19 = vld [vmem:[%s0 + $0x18] sm:$0xff]
    %v20 = vld [vmem:[%s0 + $0x20] sm:$0xff]
    %v21 = vld [vmem:[%s0 + $0x28] sm:$0xff]
    %v22 = vld [vmem:[%s0 + $0x30] sm:$0xff]
    %v23 = vld [vmem:[%s0 + $0x38] sm:$0xff]
    %v24 = vpack.c.bf16 %v17, %v16
    %v25 = vpack.c.bf16 %v19, %v18
    %v26 = vpack.c.bf16 %v21, %v20
    %v27 = vpack.c.bf16 %v23, %v22
    %v28 = vld [vmem:[%s1] sm:$0xf]
    %v29 = vld [vmem:[%s1 + $0x4] sm:$0xf]
    %v30 = vld [vmem:[%s2] sm:$0x1]
    %v32 = vlaneseq
    %v33 = vshrl.u32 %v32, 7
    %v34 = vsub.s32 0, %v33
    %v35 = vrot.slane %v30, %v34
    %v39 = vunpack.c.l.b16 %v28
    %v40 = vunpack.c.l.b16 %v29
    %v41 = vpack.c.b16 %v40, %v39
    %vm43 = vcmask 130048
    %v45 = vsel %vm43, %v24, 0
    %v48 = vsel %vm43, %v25, 0
    %v51 = vsel %vm43, %v26, 0
    %v54 = vsel %vm43, %v27, 0
    %56 = vmatprep.subr.bf16.mxu0 0
    %57 = vmatpush1.bf16.msra.mxu0 0
    %58 = vmatprep.subr.bf16.mxu0 0
    %59 = vmatpush1.bf16.msra.mxu0 0
    %60 = vmatprep.subr.bf16.mxu0 0
    %61 = vmatpush1.bf16.msra.mxu0 0
    %62 = vmatprep.subr.bf16.mxu0 0
    %63 = vmatpush1.bf16.msra.mxu0 0
    %64 = vmatprep.subr.bf16.mxu0 0
    %65 = vmatpush1.bf16.msra.mxu0 0
    %66 = vmatprep.subr.bf16.mxu0 0
    %67 = vmatpush1.bf16.msra.mxu0 0
    %68 = vmatprep.subr.bf16.mxu0 0
    %69 = vmatpush1.bf16.msra.mxu0 0
    %70 = vmatprep.subr.bf16.mxu0 0
    %71 = vmatpush1.bf16.msra.mxu0 %v41
    %72 = vmatprep.subr.bf16.mxu0 0
    %73 = vmatpush2.bf16.msra.mxu0 0
    %74 = vmatprep.subr.bf16.mxu0 0
    %75 = vmatpush2.bf16.msra.mxu0 0
    %76 = vmatprep.subr.bf16.mxu0 0
    %77 = vmatpush2.bf16.msra.mxu0 0
    %78 = vmatprep.subr.bf16.mxu0 0
    %79 = vmatpush2.bf16.msra.mxu0 0
    %80 = vmatprep.subr.bf16.mxu0 0
    %81 = vmatpush2.bf16.msra.mxu0 0
    %82 = vmatprep.subr.bf16.mxu0 0
    %83 = vmatpush2.bf16.msra.mxu0 0
    %84 = vmatprep.subr.bf16.mxu0 0
    %85 = vmatpush2.bf16.msra.mxu0 0
    %86 = vmatprep.subr.bf16.mxu0 0
    %87 = vmatpush2.bf16.msra.mxu0 0
    %88 = vmatprep.mubr.bf16.mxu0 0
    %89 = vmatmul.mubr.bf16.gmra.mxu0 %v45
    %v90 = vpop.f32.mrf.mxu0
    %v91 = vadd.f32 %v35, %v90
    %v92 = vpop.f32.mrf.mxu0
    %v93 = vpop.f32.mrf.mxu0
    %v94 = vadd.f32 %v35, %v93
    %v95 = vpop.f32.mrf.mxu0
    %96 = vmatprep.mubr.bf16.mxu0 0
    %97 = vmatmul.mubr.bf16.gmra.mxu0 %v48
    %v98 = vpop.f32.mrf.mxu0
    %v99 = vadd.f32 %v35, %v98
    %v100 = vpop.f32.mrf.mxu0
    %v101 = vpop.f32.mrf.mxu0
    %v102 = vadd.f32 %v35, %v101
    %v103 = vpop.f32.mrf.mxu0
    %104 = vmatprep.mubr.bf16.mxu0 0
    %105 = vmatmul.mubr.bf16.gmra.mxu0 %v51
    %v106 = vpop.f32.mrf.mxu0
    %v107 = vadd.f32 %v35, %v106
    %v108 = vpop.f32.mrf.mxu0
    %v109 = vpop.f32.mrf.mxu0
    %v110 = vadd.f32 %v35, %v109
    %v111 = vpop.f32.mrf.mxu0
    %112 = vmatprep.mubr.bf16.mxu0 0
    %113 = vmatmul.mubr.bf16.gmra.mxu0 %v54
    %v114 = vpop.f32.mrf.mxu0
    %v115 = vadd.f32 %v35, %v114
    %v116 = vpop.f32.mrf.mxu0
    %v117 = vpop.f32.mrf.mxu0
    %v118 = vadd.f32 %v35, %v117
    %v119 = vpop.f32.mrf.mxu0
    %120 = vdwg.mxu0
    %v121 = vpack.c.bf16 %v94, %v91
    %v122 = vpack.c.bf16 %v102, %v99
    %v123 = vpack.c.bf16 %v110, %v107
    %v124 = vpack.c.bf16 %v118, %v115
    %v129 = vunpack.c.l.b16 %v121
    %v130 = vunpack.c.h.b16 %v121
    %v131 = vunpack.c.l.b16 %v122
    %v132 = vunpack.c.h.b16 %v122
    %v133 = vunpack.c.l.b16 %v123
    %v134 = vunpack.c.h.b16 %v123
    %v135 = vunpack.c.l.b16 %v124
    %v136 = vunpack.c.h.b16 %v124
    %v137 = vpack.c.b16 %v129, %v129
    %v138 = vpack.c.b16 %v130, %v130
    %v139 = vpack.c.b16 %v131, %v131
    %v140 = vpack.c.b16 %v132, %v132
    %v141 = vpack.c.b16 %v133, %v133
    %v142 = vpack.c.b16 %v134, %v134
    %v143 = vpack.c.b16 %v135, %v135
    %v144 = vpack.c.b16 %v136, %v136
    %153 = vst [vmem:[#allocation2] sm:$0xf] %v137
    %154 = vst [vmem:[#allocation2 + $0x4] sm:$0xf] %v138
    %155 = vst [vmem:[#allocation2 + $0x8] sm:$0xf] %v139
    %156 = vst [vmem:[#allocation2 + $0xc] sm:$0xf] %v140
    %157 = vst [vmem:[#allocation2 + $0x10] sm:$0xf] %v141
    %158 = vst [vmem:[#allocation2 + $0x14] sm:$0xf] %v142
    %159 = vst [vmem:[#allocation2 + $0x18] sm:$0xf] %v143
    %160 = vst [vmem:[#allocation2 + $0x1c] sm:$0xf] %v144
    // Predicated region
    $region14: #{tpu_custom_call.1} parent=1 // pred_check
      _
    $region15: #{tpu_custom_call.1} parent=1 // pred_check_branch
      %162 = sbr.rel (0) target = $region17
    $region16: #{tpu_custom_call.1} parent=1 // pred_region
      %s164 = ssub.s32 512, 512
      %165 = vsyncadd [#allocation3], %s164
      %s166 = sshll.u32 [#allocation2], 4
      %s167 = int_to_ptr.vmem [resolvable:$true] %s166
      %172 = dma.vmem_to_hbm [thread:$0]  %s167, 512, %s3, [#allocation3], 64, 64, 4
    $region17: #{tpu_custom_call.1} parent=1 // pred_fallthru
      _
    // Predicated region
    $region18: #{tpu_custom_call.1} parent=1 // pred_check
      _
    $region19: #{tpu_custom_call.1} parent=1 // pred_check_branch
      %174 = sbr.rel (0) target = $region21
    $region20: #{tpu_custom_call.1} parent=1 // pred_region
      %175 = dma.done [#allocation3], 512
    $region21: #{tpu_custom_call.1} parent=1 // pred_fallthru
      _
    %176 = vsyncpa [#allocation3], 1

</llo_original>
